<compile_context>
chip_gen: v6e
topology: v6e:2x2x1
jax: 0.10.0
libtpu: 0.0.40
codegen_flags: <defaults>
</compile_context>

<pallas_src>
import functools

import jax
import jax.numpy as jnp
from jax import lax
from jax.experimental import pallas as pl
from jax.experimental.pallas import tpu as pltpu


def _cdiv(a, b):
    return (a + b - 1) // b


def _round_up(v, m):
    return _cdiv(v, m) * m


def _gating_kernel(x_ref, w1t_ref, b1_ref, w2t_ref, b2_ref, out_ref, *, k):
    # x_ref: (TM, L) natural token-major layout (no HBM transpose needed).
    # Contract the shared L axis on the MXU so the result is (D, TM) with
    # tokens on the 128-wide lane axis -> the whole top-k/softmax tail is
    # vreg-dense and the output store is an unmasked lane-dense (E, TM) block.
    x = x_ref[...].astype(jnp.float32)                                    # (TM, L)
    hT = lax.dot_general(w1t_ref[...], x,
                         dimension_numbers=(((1,), (1,)), ((), ())),
                         preferred_element_type=jnp.float32)              # (D, TM)
    hT = jnp.maximum(hT + b1_ref[...], 0.0)
    logitsT = jnp.dot(w2t_ref[...], hT,
                      preferred_element_type=jnp.float32) + b2_ref[...]   # (E, TM)

    num_experts = logitsT.shape[0]
    idx = lax.broadcasted_iota(jnp.int32, logitsT.shape, 0)
    neg_inf = jnp.float32(-jnp.inf)

    # Iterative top-k (k is small & static).  Ties break to the lowest expert
    # index (matches torch.topk for distinct values).  Selected entries are
    # marked by knocking them to -inf in `work`; no separate boolean buffer.
    # Note: assumes finite logits (NaN/inf inputs would yield all-zero rows
    # instead of torch's NaN propagation) — fine for real workloads.
    work = logitsT
    m_top1 = None
    for r in range(k):
        cur_max = jnp.max(work, axis=0, keepdims=True)                    # (1, TM)
        if r == 0:
            m_top1 = cur_max                 # top-1 max == softmax max
        is_max = work == cur_max
        cand = jnp.min(jnp.where(is_max, idx, num_experts),
                       axis=0, keepdims=True)
        work = jnp.where(idx == cand, neg_inf, work)

    # Softmax over the selected top-k logits; zeros elsewhere (exp(-inf) -> 0).
    masked = jnp.where(work == neg_inf, logitsT, neg_inf)
    e = jnp.exp(masked - m_top1)
    s = jnp.sum(e, axis=0, keepdims=True)
    inv = pl.reciprocal(s, approx=True)      # EUP slot (essentially free)
    inv = inv * (2.0 - s * inv)              # one Newton step -> ~f32 accuracy
    out_ref[...] = (e * inv).astype(out_ref.dtype)


def sparse_gating_network(x, w1, b1, w2, b2, *, k, tile_m=None):
    """x: [B, N, input_len] -> gating weights: [B, N, num_experts].

    w1: [input_len, d_model], b1: [d_model], w2: [d_model, num_experts],
    b2: [num_experts] (i.e. the kernel computes x @ w1, h @ w2).
    """
    B, N, L = x.shape
    D = w1.shape[1]
    E = w2.shape[1]
    M = B * N

    MAX_TILE = 8192  # ~0.5 MiB of x + out per step; far under scoped VMEM.
    if tile_m is None:
        if M <= MAX_TILE:
            tile_m = _round_up(M, 128)                  # single big tile
        else:
            # Even number of lane-aligned tiles (v7x: 2 TCs), each <= MAX_TILE.
            n_tiles = 2 * _cdiv(_cdiv(M, 2), MAX_TILE)
            tile_m = _round_up(_cdiv(M, n_tiles), 128)
    tile_m = max(128, _round_up(tile_m, 128))
    grid = _cdiv(M, tile_m)
    m_pad = grid * tile_m   # padded width only in the *output allocation*

    # Natural layouts in HBM: no transpose or pad of x (reshape of a
    # contiguous f32 array is a free view).  Weights are tiny.
    x2d = x.reshape(M, L).astype(jnp.float32)            # (M, L)
    w1t = w1.T                                           # (D, L)
    w2t = w2.T                                           # (E, D)
    b1c = b1.reshape(D, 1)
    b2c = b2.reshape(E, 1)

    cost = pl.CostEstimate(
        flops=2 * M * (L * D + D * E),
        transcendentals=M * E,
        bytes_accessed=4 * M * (L + E),
    )

    outT = pl.pallas_call(
        functools.partial(_gating_kernel, k=k),
        out_shape=jax.ShapeDtypeStruct((E, m_pad), jnp.float32),
        grid=(grid,),
        in_specs=[
            pl.BlockSpec((tile_m, L), lambda i: (i, 0)),   # x token tiles
            pl.BlockSpec((D, L), lambda i: (0, 0)),        # W1^T (resident)
            pl.BlockSpec((D, 1), lambda i: (0, 0)),        # b1
            pl.BlockSpec((E, D), lambda i: (0, 0)),        # W2^T (resident)
            pl.BlockSpec((E, 1), lambda i: (0, 0)),        # b2
        ],
        out_specs=pl.BlockSpec((E, tile_m), lambda i: (0, i)),
        compiler_params=pltpu.CompilerParams(
            dimension_semantics=("parallel",)),
        cost_estimate=cost,
    )(x2d, w1t, b1c, w2t, b2c)

    # Trim padding, transpose back to token-major, restore (B, N, E).
    # (Keep the expert-major (E, M) layout downstream if the MoE dispatch can
    # consume it — this transpose is the only remaining extra HBM pass.)
    return outT[:, :M].T.reshape(B, N, E)


def _reference(x, w1, b1, w2, b2, k):
    """Pure-JAX reference mirroring the PyTorch forward."""
    h = jax.nn.relu(jnp.einsum("bnl,ld->bnd", x, w1) + b1)
    logits = jnp.einsum("bnd,de->bne", h, w2) + b2
    top_vals, top_idx = jax.lax.top_k(logits, k)
    soft = jax.nn.softmax(top_vals, axis=-1)
    zeros = jnp.zeros_like(logits)
    return zeros.at[
        jnp.arange(x.shape[0])[:, None, None],
        jnp.arange(x.shape[1])[None, :, None],
        top_idx,
    ].set(soft)


if __name__ == "__main__":
    # configs: input_len=8, d_model=32, num_experts=8, num_used_experts=2
    B, N = 2, 8
    INPUT_LEN, D_MODEL, NUM_EXPERTS, K = 8, 32, 8, 2

    key = jax.random.PRNGKey(0)
    kx, k1, k2, k3, k4 = jax.random.split(key, 5)

    # Deterministic parameter init (nn.Linear-like uniform fan-in scaling).
    x = jax.random.normal(kx, (B, N, INPUT_LEN), dtype=jnp.float32)
    bound1 = 1.0 / (INPUT_LEN ** 0.5)
    w1 = jax.random.uniform(k1, (INPUT_LEN, D_MODEL), jnp.float32, -bound1, bound1)
    b1 = jax.random.uniform(k2, (D_MODEL,), jnp.float32, -bound1, bound1)
    bound2 = 1.0 / (D_MODEL ** 0.5)
    w2 = jax.random.uniform(k3, (D_MODEL, NUM_EXPERTS), jnp.float32, -bound2, bound2)
    b2 = jax.random.uniform(k4, (NUM_EXPERTS,), jnp.float32, -bound2, bound2)

    weights = sparse_gating_network(x, w1, b1, w2, b2, k=K)
    weights = jax.block_until_ready(weights)

    ref = _reference(x, w1, b1, w2, b2, K)
    assert weights.shape == (B, N, NUM_EXPERTS)
    assert jnp.allclose(weights, ref, atol=1e-5, rtol=1e-5), "mismatch vs reference"

    print("KERNEL_OK")
</pallas_src>

<mosaic_0001>
module attributes {stable_mosaic.version = 11 : i64} {
  func.func @_gating_kernel(%arg0: i32, %arg1: memref<128x8xf32, #tpu.memory_space<vmem>>, %arg2: memref<32x8xf32, #tpu.memory_space<vmem>>, %arg3: memref<32x1xf32, #tpu.memory_space<vmem>>, %arg4: memref<8x32xf32, #tpu.memory_space<vmem>>, %arg5: memref<8x1xf32, #tpu.memory_space<vmem>>, %arg6: memref<8x128xf32, #tpu.memory_space<vmem>>) attributes {dimension_semantics = [#tpu.dimension_semantics<parallel>], iteration_bounds = array<i64: 1>, scalar_prefetch = 0 : i64, scratch_operands = 0 : i64, tpu.core_type = #tpu.core_type<tc>, window_params = [{transform_indices = @transform_0, window_bounds = array<i64: 128, 8>}, {pipeline_mode = #tpu.pipeline_mode<synchronous>, transform_indices = @transform_1, window_bounds = array<i64: 32, 8>}, {pipeline_mode = #tpu.pipeline_mode<synchronous>, transform_indices = @transform_2, window_bounds = array<i64: 32, 1>}, {pipeline_mode = #tpu.pipeline_mode<synchronous>, transform_indices = @transform_3, window_bounds = array<i64: 8, 32>}, {pipeline_mode = #tpu.pipeline_mode<synchronous>, transform_indices = @transform_4, window_bounds = array<i64: 8, 1>}, {transform_indices = @transform_5, window_bounds = array<i64: 8, 128>}]} {
    %c0 = arith.constant 0 : index
    %c0_0 = arith.constant 0 : index
    %0 = vector.load %arg1[%c0, %c0_0] : memref<128x8xf32, #tpu.memory_space<vmem>>, vector<128x8xf32>
    %c0_1 = arith.constant 0 : index
    %c0_2 = arith.constant 0 : index
    %1 = vector.load %arg2[%c0_1, %c0_2] : memref<32x8xf32, #tpu.memory_space<vmem>>, vector<32x8xf32>
    %cst = arith.constant dense<0.000000e+00> : vector<32x128xf32>
    %2 = tpu.matmul %1, %0, %cst {dimension_numbers = #tpu.dot_dimension_numbers<[1], [1], [0], [0], [0, 0, 1, 0], [], []>} : vector<32x8xf32>, vector<128x8xf32>, vector<32x128xf32> -> vector<32x128xf32>
    %c0_3 = arith.constant 0 : index
    %c0_4 = arith.constant 0 : index
    %3 = vector.load %arg3[%c0_3, %c0_4] : memref<32x1xf32, #tpu.memory_space<vmem>>, vector<32x1xf32>
    %4 = vector.broadcast %3 : vector<32x1xf32> to vector<32x128xf32>
    %5 = arith.addf %2, %4 : vector<32x128xf32>
    %cst_5 = arith.constant 0.000000e+00 : f32
    %6 = vector.broadcast %cst_5 : f32 to vector<32x128xf32>
    %7 = arith.maximumf %5, %6 : vector<32x128xf32>
    %c0_6 = arith.constant 0 : index
    %c0_7 = arith.constant 0 : index
    %8 = vector.load %arg4[%c0_6, %c0_7] : memref<8x32xf32, #tpu.memory_space<vmem>>, vector<8x32xf32>
    %cst_8 = arith.constant dense<0.000000e+00> : vector<8x128xf32>
    %9 = tpu.matmul %8, %7, %cst_8 {dimension_numbers = #tpu.dot_dimension_numbers<[1], [0], [0], [1], [0, 0, 1, 1], [], []>} : vector<8x32xf32>, vector<32x128xf32>, vector<8x128xf32> -> vector<8x128xf32>
    %c0_9 = arith.constant 0 : index
    %c0_10 = arith.constant 0 : index
    %10 = vector.load %arg5[%c0_9, %c0_10] : memref<8x1xf32, #tpu.memory_space<vmem>>, vector<8x1xf32>
    %11 = vector.broadcast %10 : vector<8x1xf32> to vector<8x128xf32>
    %12 = arith.addf %9, %11 : vector<8x128xf32>
    %13 = tpu.iota {dimensions = array<i32: 0>} : vector<8x128xi32>
    %cst_11 = arith.constant dense<0xFF800000> : vector<128xf32>
    %14 = vector.multi_reduction <maximumf>, %12, %cst_11 [0] : vector<8x128xf32> to vector<128xf32>
    %15 = vector.shape_cast %14 : vector<128xf32> to vector<1x128xf32>
    %16 = vector.broadcast %15 : vector<1x128xf32> to vector<8x128xf32>
    %17 = arith.cmpf oeq, %12, %16 : vector<8x128xf32>
    %c8_i32 = arith.constant 8 : i32
    %18 = vector.broadcast %c8_i32 : i32 to vector<8x128xi32>
    %19 = arith.select %17, %13, %18 : vector<8x128xi1>, vector<8x128xi32>
    %cst_12 = arith.constant dense<2147483647> : vector<128xi32>
    %20 = vector.multi_reduction <minsi>, %19, %cst_12 [0] : vector<8x128xi32> to vector<128xi32>
    %21 = vector.shape_cast %20 : vector<128xi32> to vector<1x128xi32>
    %22 = vector.broadcast %21 : vector<1x128xi32> to vector<8x128xi32>
    %23 = arith.cmpi eq, %13, %22 : vector<8x128xi32>
    %cst_13 = arith.constant 0xFF800000 : f32
    %24 = vector.broadcast %cst_13 : f32 to vector<8x128xf32>
    %25 = arith.select %23, %24, %12 : vector<8x128xi1>, vector<8x128xf32>
    %cst_14 = arith.constant dense<0xFF800000> : vector<128xf32>
    %26 = vector.multi_reduction <maximumf>, %25, %cst_14 [0] : vector<8x128xf32> to vector<128xf32>
    %27 = vector.shape_cast %26 : vector<128xf32> to vector<1x128xf32>
    %28 = vector.broadcast %27 : vector<1x128xf32> to vector<8x128xf32>
    %29 = arith.cmpf oeq, %25, %28 : vector<8x128xf32>
    %c8_i32_15 = arith.constant 8 : i32
    %30 = vector.broadcast %c8_i32_15 : i32 to vector<8x128xi32>
    %31 = arith.select %29, %13, %30 : vector<8x128xi1>, vector<8x128xi32>
    %cst_16 = arith.constant dense<2147483647> : vector<128xi32>
    %32 = vector.multi_reduction <minsi>, %31, %cst_16 [0] : vector<8x128xi32> to vector<128xi32>
    %33 = vector.shape_cast %32 : vector<128xi32> to vector<1x128xi32>
    %34 = vector.broadcast %33 : vector<1x128xi32> to vector<8x128xi32>
    %35 = arith.cmpi eq, %13, %34 : vector<8x128xi32>
    %cst_17 = arith.constant 0xFF800000 : f32
    %36 = vector.broadcast %cst_17 : f32 to vector<8x128xf32>
    %37 = arith.select %35, %36, %25 : vector<8x128xi1>, vector<8x128xf32>
    %cst_18 = arith.constant 0xFF800000 : f32
    %38 = vector.broadcast %cst_18 : f32 to vector<8x128xf32>
    %39 = arith.cmpf oeq, %37, %38 : vector<8x128xf32>
    %cst_19 = arith.constant 0xFF800000 : f32
    %40 = vector.broadcast %cst_19 : f32 to vector<8x128xf32>
    %41 = arith.select %39, %12, %40 : vector<8x128xi1>, vector<8x128xf32>
    %42 = vector.broadcast %15 : vector<1x128xf32> to vector<8x128xf32>
    %43 = arith.subf %41, %42 : vector<8x128xf32>
    %44 = math.exp %43 : vector<8x128xf32>
    %cst_20 = arith.constant dense<0.000000e+00> : vector<128xf32>
    %45 = vector.multi_reduction <add>, %44, %cst_20 [0] : vector<8x128xf32> to vector<128xf32>
    %46 = vector.shape_cast %45 : vector<128xf32> to vector<1x128xf32>
    %47 = tpu.reciprocal %46 {approx = true} : vector<1x128xf32> -> vector<1x128xf32>
    %48 = arith.mulf %46, %47 : vector<1x128xf32>
    %cst_21 = arith.constant 2.000000e+00 : f32
    %49 = vector.broadcast %cst_21 : f32 to vector<1x128xf32>
    %50 = arith.subf %49, %48 : vector<1x128xf32>
    %51 = arith.mulf %47, %50 : vector<1x128xf32>
    %52 = vector.broadcast %51 : vector<1x128xf32> to vector<8x128xf32>
    %53 = arith.mulf %44, %52 : vector<8x128xf32>
    %c0_22 = arith.constant 0 : index
    %c0_23 = arith.constant 0 : index
    %54 = vector.load %arg6[%c0_22, %c0_23] : memref<8x128xf32, #tpu.memory_space<vmem>>, vector<8x128xf32>
    tpu.vector_store %arg6[%c0_22, %c0_23], %53 {strides = array<i32>} : memref<8x128xf32, #tpu.memory_space<vmem>>, vector<8x128xf32>,
    return
  }
  func.func @transform_0(%arg0: i32) -> (i32, i32) {
    %c0_i32 = arith.constant 0 : i32
    %c0_i32_0 = arith.constant 0 : i32
    return %arg0, %c0_i32 : i32, i32
  }
  func.func @transform_1(%arg0: i32) -> (i32, i32) {
    %c0_i32 = arith.constant 0 : i32
    %c0_i32_0 = arith.constant 0 : i32
    %c0_i32_1 = arith.constant 0 : i32
    return %c0_i32, %c0_i32_0 : i32, i32
  }
  func.func @transform_2(%arg0: i32) -> (i32, i32) {
    %c0_i32 = arith.constant 0 : i32
    %c0_i32_0 = arith.constant 0 : i32
    %c0_i32_1 = arith.constant 0 : i32
    return %c0_i32, %c0_i32_0 : i32, i32
  }
  func.func @transform_3(%arg0: i32) -> (i32, i32) {
    %c0_i32 = arith.constant 0 : i32
    %c0_i32_0 = arith.constant 0 : i32
    %c0_i32_1 = arith.constant 0 : i32
    return %c0_i32, %c0_i32_0 : i32, i32
  }
  func.func @transform_4(%arg0: i32) -> (i32, i32) {
    %c0_i32 = arith.constant 0 : i32
    %c0_i32_0 = arith.constant 0 : i32
    %c0_i32_1 = arith.constant 0 : i32
    return %c0_i32, %c0_i32_0 : i32, i32
  }
  func.func @transform_5(%arg0: i32) -> (i32, i32) {
    %c0_i32 = arith.constant 0 : i32
    %c0_i32_0 = arith.constant 0 : i32
    return %c0_i32, %arg0 : i32, i32
  }
}

</mosaic_0001>

<llo_original>
// kernel: tpu_custom_call.1
$region0: #{tpu_custom_call.1}
  #allocation0 [shape = 'u32[]', space=smem, size = 0x4, offset = 0x4, fixed_abs, tag = 'smem constant byte address 0x4 - core index']
  #allocation1 [shape = 'u32[144,128]{1,0:T(1,128)}', space=vmem, size = 0x12000, scoped, tag = 'internal scratch']
  %s0 = inlined_call_operand.vmem [shape: f32[16,8], index: 0, kind: input, shape index: {}]
  %s1 = inlined_call_operand.vmem [shape: f32[32,8], index: 1, kind: input, shape index: {}]
  %s2 = inlined_call_operand.vmem [shape: f32[32,1], index: 2, kind: input, shape index: {}]
  %s3 = inlined_call_operand.vmem [shape: f32[8,32], index: 3, kind: input, shape index: {}]
  %s4 = inlined_call_operand.vmem [shape: f32[8,1], index: 4, kind: input, shape index: {}]
  %s5 = inlined_call_operand.hbm [shape: f32[8,128], index: 5, kind: output, shape index: {}]
  %s6 = sld [smem:[#allocation0]]
  $region30: #{tpu_custom_call.1} parent=0
    _
  %s8 = ssub.s32 1, %s6
  %s9 = scalar_select 0, %s8, %s6
  $region1: #{tpu_custom_call.1} parent=0
    #allocation2 [shape = 'u8[4096]{0}', space=vmem, size = 0x1000, scoped, tag = 'output window, operand 0, single buffered']
    #allocation3 [shape = 's32[1]{0}', space=sflag, size = 0x4, scoped, tag = 'scoped memory for tpu_custom_call.1']
    %10 = vsyncpa [#allocation3], 0
    // Predicated region
    $region2: #{tpu_custom_call.1} parent=1 // pred_check
      _
    $region3: #{tpu_custom_call.1} parent=1 // pred_check_branch
      %12 = sbr.rel (0) target = $region5
    $region4: #{tpu_custom_call.1} parent=1 // pred_region
      _
    $region5: #{tpu_custom_call.1} parent=1 // pred_fallthru
      _
    // Predicated region
    $region6: #{tpu_custom_call.1} parent=1 // pred_check
      _
    $region7: #{tpu_custom_call.1} parent=1 // pred_check_branch
      %14 = sbr.rel (0) target = $region9
    $region8: #{tpu_custom_call.1} parent=1 // pred_region
      _
    $region9: #{tpu_custom_call.1} parent=1 // pred_fallthru
      _
    // Predicated region
    $region10: #{tpu_custom_call.1} parent=1 // pred_check
      _
    $region11: #{tpu_custom_call.1} parent=1 // pred_check_branch
      %16 = sbr.rel (0) target = $region13
    $region12: #{tpu_custom_call.1} parent=1 // pred_region
      _
    $region13: #{tpu_custom_call.1} parent=1 // pred_fallthru
      _
    // Predicated region
    $region14: #{tpu_custom_call.1} parent=1 // pred_check
      _
    $region15: #{tpu_custom_call.1} parent=1 // pred_check_branch
      %18 = sbr.rel (0) target = $region17
    $region16: #{tpu_custom_call.1} parent=1 // pred_region
      _
    $region17: #{tpu_custom_call.1} parent=1 // pred_fallthru
      _
    // Predicated region
    $region18: #{tpu_custom_call.1} parent=1 // pred_check
      _
    $region19: #{tpu_custom_call.1} parent=1 // pred_check_branch
      %20 = sbr.rel (0) target = $region21
    $region20: #{tpu_custom_call.1} parent=1 // pred_region
      _
    $region21: #{tpu_custom_call.1} parent=1 // pred_fallthru
      _
    %v21 = vld [vmem:[%s0] sm:$0xff]
    %v22 = vld [vmem:[%s0 + $0x8] sm:$0xff]
    %v23 = vld [vmem:[%s0 + $0x10] sm:$0xff]
    %v24 = vld [vmem:[%s0 + $0x18] sm:$0xff]
    %v25 = vld [vmem:[%s0 + $0x20] sm:$0xff]
    %v26 = vld [vmem:[%s0 + $0x28] sm:$0xff]
    %v27 = vld [vmem:[%s0 + $0x30] sm:$0xff]
    %v28 = vld [vmem:[%s0 + $0x38] sm:$0xff]
    %v29 = vld [vmem:[%s0 + $0x40] sm:$0xff]
    %v30 = vld [vmem:[%s0 + $0x48] sm:$0xff]
    %v31 = vld [vmem:[%s0 + $0x50] sm:$0xff]
    %v32 = vld [vmem:[%s0 + $0x58] sm:$0xff]
    %v33 = vld [vmem:[%s0 + $0x60] sm:$0xff]
    %v34 = vld [vmem:[%s0 + $0x68] sm:$0xff]
    %v35 = vld [vmem:[%s0 + $0x70] sm:$0xff]
    %v36 = vld [vmem:[%s0 + $0x78] sm:$0xff]
    %v37 = vld [vmem:[%s1] sm:$0xff]
    %v38 = vld [vmem:[%s1 + $0x8] sm:$0xff]
    %v39 = vld [vmem:[%s1 + $0x10] sm:$0xff]
    %v40 = vld [vmem:[%s1 + $0x18] sm:$0xff]
    %v41 = vld [vmem:[%s2] sm:$0xff]
    %v42 = vld [vmem:[%s2 + $0x8] sm:$0xff]
    %v43 = vld [vmem:[%s2 + $0x10] sm:$0xff]
    %v44 = vld [vmem:[%s2 + $0x18] sm:$0xff]
    %46 = vset.pattern.permute.xlu0 0
    %47 = vperm.xlu0 %46, %v41
    %v48 = vpop.permute.xlu0 %47
    %51 = vset.pattern.permute.xlu0 0
    %52 = vperm.xlu0 %51, %v42
    %v53 = vpop.permute.xlu0 %52
    %56 = vset.pattern.permute.xlu0 0
    %57 = vperm.xlu0 %56, %v43
    %v58 = vpop.permute.xlu0 %57
    %61 = vset.pattern.permute.xlu0 0
    %62 = vperm.xlu0 %61, %v44
    %v63 = vpop.permute.xlu0 %62
    %vm65 = vcmask 64512
    %v67 = vsel %vm65, %v37, 0
    %v70 = vsel %vm65, %v38, 0
    %v73 = vsel %vm65, %v39, 0
    %v76 = vsel %vm65, %v40, 0
    %v79 = vsel %vm65, %v21, 0
    %v82 = vsel %vm65, %v22, 0
    %v85 = vsel %vm65, %v23, 0
    %v88 = vsel %vm65, %v24, 0
    %v91 = vsel %vm65, %v25, 0
    %v94 = vsel %vm65, %v26, 0
    %v97 = vsel %vm65, %v27, 0
    %v100 = vsel %vm65, %v28, 0
    %v103 = vsel %vm65, %v29, 0
    %v106 = vsel %vm65, %v30, 0
    %v109 = vsel %vm65, %v31, 0
    %v112 = vsel %vm65, %v32, 0
    %v115 = vsel %vm65, %v33, 0
    %v118 = vsel %vm65, %v34, 0
    %v121 = vsel %vm65, %v35, 0
    %v124 = vsel %vm65, %v36, 0
    %126 = vmatprep.subr.mxu0 0.0
    %127 = vmatpush1.xpose.msra.mxu0 %v124
    %128 = vmatprep.subr.mxu0 0.0
    %129 = vmatpush1.xpose.msra.mxu0 %v121
    %130 = vmatprep.subr.mxu0 0.0
    %131 = vmatpush1.xpose.msra.mxu0 %v118
    %132 = vmatprep.subr.mxu0 0.0
    %133 = vmatpush1.xpose.msra.mxu0 %v115
    %134 = vmatprep.subr.mxu0 0.0
    %135 = vmatpush1.xpose.msra.mxu0 %v112
    %136 = vmatprep.subr.mxu0 0.0
    %137 = vmatpush1.xpose.msra.mxu0 %v109
    %138 = vmatprep.subr.mxu0 0.0
    %139 = vmatpush1.xpose.msra.mxu0 %v106
    %140 = vmatprep.subr.mxu0 0.0
    %141 = vmatpush1.xpose.msra.mxu0 %v103
    %142 = vmatprep.subr.mxu0 0.0
    %143 = vmatpush1.xpose.msra.mxu0 %v100
    %144 = vmatprep.subr.mxu0 0.0
    %145 = vmatpush1.xpose.msra.mxu0 %v97
    %146 = vmatprep.subr.mxu0 0.0
    %147 = vmatpush1.xpose.msra.mxu0 %v94
    %148 = vmatprep.subr.mxu0 0.0
    %149 = vmatpush1.xpose.msra.mxu0 %v91
    %150 = vmatprep.subr.mxu0 0.0
    %151 = vmatpush1.xpose.msra.mxu0 %v88
    %152 = vmatprep.subr.mxu0 0.0
    %153 = vmatpush1.xpose.msra.mxu0 %v85
    %154 = vmatprep.subr.mxu0 0.0
    %155 = vmatpush1.xpose.msra.mxu0 %v82
    %156 = vmatprep.subr.mxu0 0.0
    %157 = vmatpush1.xpose.msra.mxu0 %v79
    %158 = vmatprep.subr.mxu0 0.0
    %159 = vmatpush2.xpose.msra.mxu0 0.0
    %160 = vmatprep.subr.mxu0 0.0
    %161 = vmatpush2.xpose.msra.mxu0 0.0
    %162 = vmatprep.subr.mxu0 0.0
    %163 = vmatpush2.xpose.msra.mxu0 0.0
    %164 = vmatprep.subr.mxu0 0.0
    %165 = vmatpush2.xpose.msra.mxu0 0.0
    %166 = vmatprep.subr.mxu0 0.0
    %167 = vmatpush2.xpose.msra.mxu0 0.0
    %168 = vmatprep.subr.mxu0 0.0
    %169 = vmatpush2.xpose.msra.mxu0 0.0
    %170 = vmatprep.subr.mxu0 0.0
    %171 = vmatpush2.xpose.msra.mxu0 0.0
    %172 = vmatprep.subr.mxu0 0.0
    %173 = vmatpush2.xpose.msra.mxu0 0.0
    %174 = vmatprep.subr.mxu0 0.0
    %175 = vmatpush2.xpose.msra.mxu0 0.0
    %176 = vmatprep.subr.mxu0 0.0
    %177 = vmatpush2.xpose.msra.mxu0 0.0
    %178 = vmatprep.subr.mxu0 0.0
    %179 = vmatpush2.xpose.msra.mxu0 0.0
    %180 = vmatprep.subr.mxu0 0.0
    %181 = vmatpush2.xpose.msra.mxu0 0.0
    %182 = vmatprep.subr.mxu0 0.0
    %183 = vmatpush2.xpose.msra.mxu0 0.0
    %184 = vmatprep.subr.mxu0 0.0
    %185 = vmatpush2.xpose.msra.mxu0 0.0
    %186 = vmatprep.subr.mxu0 0.0
    %187 = vmatpush2.xpose.msra.mxu0 0.0
    %188 = vmatprep.subr.mxu0 0.0
    %189 = vmatpush2.xpose.msra.mxu0 0.0
    %190 = vmatprep.mubr.f32.mxu0 0.0
    %191 = vmatmul.mubr.f32.gmra.mxu0 %v67
    %v192 = vpop.f32.mrf.mxu0
    %v193 = vadd.f32 %v48, %v192
    %v194 = vpop.f32.mrf.mxu0
    %195 = vmatprep.mubr.f32.mxu0 0.0
    %196 = vmatmul.mubr.f32.gmra.mxu0 %v70
    %v197 = vpop.f32.mrf.mxu0
    %v198 = vadd.f32 %v53, %v197
    %v199 = vpop.f32.mrf.mxu0
    %200 = vmatprep.mubr.f32.mxu0 0.0
    %201 = vmatmul.mubr.f32.gmra.mxu0 %v73
    %v202 = vpop.f32.mrf.mxu0
    %v203 = vadd.f32 %v58, %v202
    %v204 = vpop.f32.mrf.mxu0
    %205 = vmatprep.mubr.f32.mxu0 0.0
    %206 = vmatmul.mubr.f32.gmra.mxu0 %v76
    %v207 = vpop.f32.mrf.mxu0
    %v208 = vadd.f32 %v63, %v207
    %v209 = vpop.f32.mrf.mxu0
    %210 = vdwg.mxu0
    %v211 = vmax.f32 %v193, 0.0
    %v212 = vmax.f32 %v198, 0.0
    %v213 = vmax.f32 %v203, 0.0
    %v214 = vmax.f32 %v208, 0.0
    %v215 = vld [vmem:[%s3] sm:$0xff]
    %v216 = vld [vmem:[%s4] sm:$0xff]
    %218 = vset.pattern.permute.xlu0 0
    %219 = vperm.xlu0 %218, %v216
    %v220 = vpop.permute.xlu0 %219
    %vm222 = vcmask 261120
    %v224 = vsel %vm222, %v215, 0
    %226 = vmatprep.subr.mxu0 0.0
    %227 = vmatpush1.msra.mxu0 0.0
    %228 = vmatprep.subr.mxu0 0.0
    %229 = vmatpush1.msra.mxu0 0.0
    %230 = vmatprep.subr.mxu0 0.0
    %231 = vmatpush1.msra.mxu0 0.0
    %232 = vmatprep.subr.mxu0 0.0
    %233 = vmatpush1.msra.mxu0 0.0
    %234 = vmatprep.subr.mxu0 0.0
    %235 = vmatpush1.msra.mxu0 0.0
    %236 = vmatprep.subr.mxu0 0.0
    %237 = vmatpush1.msra.mxu0 0.0
    %238 = vmatprep.subr.mxu0 0.0
    %239 = vmatpush1.msra.mxu0 0.0
    %240 = vmatprep.subr.mxu0 0.0
    %241 = vmatpush1.msra.mxu0 0.0
    %242 = vmatprep.subr.mxu0 0.0
    %243 = vmatpush1.msra.mxu0 0.0
    %244 = vmatprep.subr.mxu0 0.0
    %245 = vmatpush1.msra.mxu0 0.0
    %246 = vmatprep.subr.mxu0 0.0
    %247 = vmatpush1.msra.mxu0 0.0
    %248 = vmatprep.subr.mxu0 0.0
    %249 = vmatpush1.msra.mxu0 0.0
    %250 = vmatprep.subr.mxu0 0.0
    %251 = vmatpush1.msra.mxu0 %v214
    %252 = vmatprep.subr.mxu0 0.0
    %253 = vmatpush1.msra.mxu0 %v213
    %254 = vmatprep.subr.mxu0 0.0
    %255 = vmatpush1.msra.mxu0 %v212
    %256 = vmatprep.subr.mxu0 0.0
    %257 = vmatpush1.msra.mxu0 %v211
    %258 = vmatprep.subr.mxu0 0.0
    %259 = vmatpush2.msra.mxu0 0.0
    %260 = vmatprep.subr.mxu0 0.0
    %261 = vmatpush2.msra.mxu0 0.0
    %262 = vmatprep.subr.mxu0 0.0
    %263 = vmatpush2.msra.mxu0 0.0
    %264 = vmatprep.subr.mxu0 0.0
    %265 = vmatpush2.msra.mxu0 0.0
    %266 = vmatprep.subr.mxu0 0.0
    %267 = vmatpush2.msra.mxu0 0.0
    %268 = vmatprep.subr.mxu0 0.0
    %269 = vmatpush2.msra.mxu0 0.0
    %270 = vmatprep.subr.mxu0 0.0
    %271 = vmatpush2.msra.mxu0 0.0
    %272 = vmatprep.subr.mxu0 0.0
    %273 = vmatpush2.msra.mxu0 0.0
    %274 = vmatprep.subr.mxu0 0.0
    %275 = vmatpush2.msra.mxu0 0.0
    %276 = vmatprep.subr.mxu0 0.0
    %277 = vmatpush2.msra.mxu0 0.0
    %278 = vmatprep.subr.mxu0 0.0
    %279 = vmatpush2.msra.mxu0 0.0
    %280 = vmatprep.subr.mxu0 0.0
    %281 = vmatpush2.msra.mxu0 0.0
    %282 = vmatprep.subr.mxu0 0.0
    %283 = vmatpush2.msra.mxu0 0.0
    %284 = vmatprep.subr.mxu0 0.0
    %285 = vmatpush2.msra.mxu0 0.0
    %286 = vmatprep.subr.mxu0 0.0
    %287 = vmatpush2.msra.mxu0 0.0
    %288 = vmatprep.subr.mxu0 0.0
    %289 = vmatpush2.msra.mxu0 0.0
    %290 = vmatprep.mubr.f32.mxu0 0.0
    %291 = vmatmul.mubr.f32.gmra.mxu0 %v224
    %v292 = vpop.f32.mrf.mxu0
    %v293 = vadd.f32 %v220, %v292
    %v294 = vpop.f32.mrf.mxu0
    %295 = vdwg.mxu0
    %v296 = vlaneseq
    %v297 = vshrl.u32 %v296, 7
    %v298 = vrot.slane %v293, 4
    %v299 = vmax.f32 %v293, %v298
    %v300 = vrot.slane %v299, 2
    %v301 = vmax.f32 %v299, %v300
    %v302 = vrot.slane %v301, 1
    %v303 = vmax.f32 %v301, %v302
    %vm304 = vcmp.eq.f32.partialorder %v293, %v303
    %v305 = vsel %vm304, %v297, 8
    %v306 = vrot.slane %v305, 4
    %vm307 = vcmp.lt.s32.totalorder %v305, %v306
    %v308 = vsel %vm307, %v305, %v306
    %v309 = vrot.slane %v308, 2
    %vm310 = vcmp.lt.s32.totalorder %v308, %v309
    %v311 = vsel %vm310, %v308, %v309
    %v312 = vrot.slane %v311, 1
    %vm313 = vcmp.lt.s32.totalorder %v311, %v312
    %v314 = vsel %vm313, %v311, %v312
    %vm315 = vcmp.eq.s32.totalorder %v297, %v314
    %v316 = vsel %vm315, -inf, %v293
    %v317 = vrot.slane %v316, 4
    %v318 = vmax.f32 %v316, %v317
    %v319 = vrot.slane %v318, 2
    %v320 = vmax.f32 %v318, %v319
    %v321 = vrot.slane %v320, 1
    %v322 = vmax.f32 %v320, %v321
    %vm323 = vcmp.eq.f32.partialorder %v316, %v322
    %v324 = vsel %vm323, %v297, 8
    %v325 = vrot.slane %v324, 4
    %vm326 = vcmp.lt.s32.totalorder %v324, %v325
    %v327 = vsel %vm326, %v324, %v325
    %v328 = vrot.slane %v327, 2
    %vm329 = vcmp.lt.s32.totalorder %v327, %v328
    %v330 = vsel %vm329, %v327, %v328
    %v331 = vrot.slane %v330, 1
    %vm332 = vcmp.lt.s32.totalorder %v330, %v331
    %v333 = vsel %vm332, %v330, %v331
    %vm334 = vcmp.eq.s32.totalorder %v297, %v333
    %v335 = vsel %vm334, -inf, %v316
    %vm336 = vcmp.eq.f32.partialorder %v335, -inf
    %v337 = vsel %vm336, %v293, -inf
    %v338 = vsub.f32 %v337, %v303
    %v339 = vmul.f32 %v338, 1.442695
    %v340 = vpow.pop %v339
    %v341 = vrot.slane %v340, 4
    %v342 = vadd.f32 %v340, %v341
    %v343 = vrot.slane %v342, 2
    %v344 = vadd.f32 %v342, %v343
    %v345 = vrot.slane %v344, 1
    %v346 = vadd.f32 %v344, %v345
    %v347 = vrcp.pop %v346
    %v348 = vmul.f32 %v346, %v347
    %v349 = vsub.f32 2.0, %v348
    %v350 = vmul.f32 %v347, %v349
    %v351 = vmul.f32 %v340, %v350
    %352 = vst [vmem:[#allocation2] sm:$0xff] %v351
    // Predicated region
    $region22: #{tpu_custom_call.1} parent=1 // pred_check
      _
    $region23: #{tpu_custom_call.1} parent=1 // pred_check_branch
      %354 = sbr.rel (0) target = $region25
    $region24: #{tpu_custom_call.1} parent=1 // pred_region
      %s356 = ssub.s32 128, 128
      %357 = vsyncadd [#allocation3], %s356
      %s359 = sshll.u32 [#allocation2], 4
      %s360 = int_to_ptr.vmem [resolvable:$true] %s359
      %362 = dma.vmem_to_hbm [thread:$0]  %s360, 128, %s5, [#allocation3]
    $region25: #{tpu_custom_call.1} parent=1 // pred_fallthru
      _
    // Predicated region
    $region26: #{tpu_custom_call.1} parent=1 // pred_check
      _
    $region27: #{tpu_custom_call.1} parent=1 // pred_check_branch
      %364 = sbr.rel (0) target = $region29
    $region28: #{tpu_custom_call.1} parent=1 // pred_region
      %365 = dma.done [#allocation3], 128
    $region29: #{tpu_custom_call.1} parent=1 // pred_fallthru
      _
    %366 = vsyncpa [#allocation3], 1

</llo_original>
